<compile_context>
chip_gen: v6e
topology: v6e:2x2x1
jax: 0.10.0
libtpu: 0.0.40
codegen_flags: <defaults>
</compile_context>

<pallas_src>
import numpy as np
import jax
import jax.numpy as jnp
from jax.experimental import pallas as pl
from jax.experimental.pallas import tpu as pltpu

# ----------------------------- model config (small) -----------------------------
VOCAB_SIZE = 100
EMBED_DIM = 32
NUM_CLASSES = 2
KERNEL_SIZES = (3, 4, 5)
NUM_FILTERS = 16
BATCH = 2
SEQ_LEN = 16

K_MAX = max(KERNEL_SIZES)
F_TOTAL = NUM_FILTERS * len(KERNEL_SIZES)   # 48 fused output channels
V_PAD = 128                                 # vocab padded to one full lane tile per tap
BIAS_ROW = VOCAB_SIZE                       # spare padded row (tap-0 block) holding the conv bias
BL = BATCH * SEQ_LEN


# --------------------------------- Pallas kernel --------------------------------
def textcnn_kernel(tok_ref, tw_ref, wfc_ref, bfc_ref, out_ref):
    """Fused one-hot-gather conv (+bias) + ReLU + time-mask + max-over-time + classifier.

    tok_ref : (B*L, K_MAX)        int32  tok_ref[r, j] = tokens[(r + j) % (B*L)]
    tw_ref  : (K_MAX*V_PAD, 3F)   bf16   folded weights; row j*V_PAD+v = (emb @ W_j)[v];
                                         row BIAS_ROW of the tap-0 block = fused conv bias
    wfc_ref : (3F, C)             f32    classifier weight
    bfc_ref : (1, C)              f32    classifier bias
    out_ref : (B, C)              f32    logits
    """
    BL_, KM = tok_ref.shape
    F3 = tw_ref.shape[1]
    B = out_ref.shape[0]
    L = BL_ // B

    tok = tok_ref[...]                                              # (BL, K_MAX) int32
    viota = jax.lax.broadcasted_iota(jnp.int32, (BL_, V_PAD), 1)    # lane index 0..V_PAD-1

    # One big one-hot (BL, K_MAX*V_PAD): block j selects row tok[r, j] of tap-j's folded table.
    # Tap-0 block additionally gets a constant-1 column at BIAS_ROW -> bias comes out of the MXU.
    blocks = []
    for j in range(KM):
        hit = tok[:, j:j + 1] == viota                              # (BL, V_PAD) lane-bcast cmp
        if j == 0:
            hit = jnp.logical_or(hit, viota == BIAS_ROW)
        blocks.append(jnp.where(hit, 1.0, 0.0).astype(jnp.bfloat16))
    one_hot = jnp.concatenate(blocks, axis=1)                       # (BL, K_MAX*V_PAD) bf16

    # Single MXU matmul fuses: embedding gather + all conv taps + bias (f32 accumulation).
    conv = jnp.dot(one_hot, tw_ref[...], preferred_element_type=jnp.float32)   # (BL, 3F) f32
    act = jnp.maximum(conv, 0.0)                                    # ReLU, f32 (v5e-safe)

    # Time-validity mask from iotas + trace-time constants (no extra kernel input).  Masking
    # with 0 AFTER ReLU is exact: valid activations are >= 0, so padded/wrapped positions can
    # never win the max-over-time.
    t_idx = jax.lax.broadcasted_iota(jnp.int32, (BL_, F3), 0) % L   # L is a power of two
    col = jax.lax.broadcasted_iota(jnp.int32, (BL_, F3), 1)
    thr = jnp.full((BL_, F3), L - KERNEL_SIZES[0], jnp.int32)
    for i in range(1, len(KERNEL_SIZES)):
        thr = jnp.where(col >= i * NUM_FILTERS, L - KERNEL_SIZES[i], thr)
    act = jnp.where(t_idx <= thr, act, 0.0)

    # Max over time: tile-aligned reshape (L multiple of 8) + one cross-sublane reduction.
    pooled = jnp.max(act.reshape(B, L, F3), axis=1)                 # (B, 3F) f32

    # TODO(synk): nn.Dropout omitted (inference semantics -> identity).
    logits = jnp.dot(pooled, wfc_ref[...], preferred_element_type=jnp.float32) + bfc_ref[...]
    out_ref[...] = logits.astype(out_ref.dtype)                     # (B, 2)


# ------------------------------------ wrapper ------------------------------------
# Trace-time constant: token position feeding tap j at flat output position r.  Wrapped /
# cross-batch positions only ever feed time steps the kernel masks out before the max.
_SHIFT_IDX = (np.arange(BL)[:, None] + np.arange(K_MAX)[None, :]) % BL          # (BL, K_MAX)


@jax.jit
def textcnn_forward(x_tokens, fused):
    """x_tokens: (B, L) int32 token ids. fused: output of fuse_params(). Returns (B, C) logits."""
    B, L = x_tokens.shape
    # Single constant-index gather replaces the old 5x roll + stack (one tiny XLA op total).
    tok_mat = x_tokens.reshape(B * L)[_SHIFT_IDX]                    # (B*L, K_MAX) int32

    vmem = pl.BlockSpec(memory_space=pltpu.MemorySpace.VMEM)
    # No grid: the whole problem is ~250 KB of VMEM (incl. the 60 KB folded table), so a single
    # untiled invocation is right at this size on v5e/v6e/v7x.
    # TODO(synk): at larger B*L add a batch grid axis with dimension_semantics=("parallel",) so
    # v7x shards across its 2 TensorCores; at realistic vocab sizes drop the one-hot-matmul
    # gather (FLOPs ~ B*L*V, table ~ K_MAX*V_PAD*3F bytes vs v7x's 64 MiB VMEM) in favor of an
    # in-VMEM embedding table + dynamic-DMA row fetch.
    return pl.pallas_call(
        textcnn_kernel,
        out_shape=jax.ShapeDtypeStruct((B, NUM_CLASSES), jnp.float32),
        in_specs=[vmem] * 4,
        out_specs=vmem,
    )(tok_mat, fused['tw'], fused['wfc'], fused['bfc'])


# ------------------------------- parameter handling -------------------------------
def init_params(key):
    keys = jax.random.split(key, 9)
    params = {}
    params['embedding'] = 0.1 * jax.random.normal(keys[0], (VOCAB_SIZE, EMBED_DIM), jnp.float32)
    # Conv1d weights stored as (K, E, F)  (== PyTorch (F, E, K) transposed).
    for i, (k, wk, bk) in enumerate(zip(KERNEL_SIZES, ('w3', 'w4', 'w5'), ('b3', 'b4', 'b5'))):
        params[wk] = 0.1 * jax.random.normal(keys[1 + 2 * i], (k, EMBED_DIM, NUM_FILTERS), jnp.float32)
        params[bk] = 0.1 * jax.random.normal(keys[2 + 2 * i], (1, NUM_FILTERS), jnp.float32)
    params['wfc'] = 0.1 * jax.random.normal(keys[7], (F_TOTAL, NUM_CLASSES), jnp.float32)
    params['bfc'] = 0.1 * jax.random.normal(keys[8], (1, NUM_CLASSES), jnp.float32)
    return params


def fuse_params(params):
    """One-time prep (outside jit):
       * zero-pad each branch's (k, E, F) conv weight to K_MAX taps and concatenate the branches
         along the filter axis -> W_fused (K_MAX, E, 3F).  Taps j >= k are zero, so wrapped /
         cross-batch tokens feeding them contribute nothing (required by the in-kernel masking).
       * fold the embedding table into the conv:  TW[j] = table @ W_fused[j]  (exact algebra:
         one-hot-gather-then-matmul == row-select of the precomputed product),
       * zero-pad the vocab axis to V_PAD = 128 (the one-hot never selects pad rows, so exact;
         aligns the MXU contraction to full 128-deep passes),
       * park the fused conv bias in spare row BIAS_ROW of the tap-0 block (matched by a
         constant-1 one-hot column in the kernel),
       * flatten to one (K_MAX*V_PAD, 3F) bf16 MXU operand (f32 accumulation happens in-kernel)."""
    assert VOCAB_SIZE <= BIAS_ROW < V_PAD, "need a spare padded vocab row for the folded bias"
    for k in KERNEL_SIZES:
        assert k <= SEQ_LEN and SEQ_LEN - k >= 0, "kernel longer than sequence"

    blocks = []
    for k, wk in zip(KERNEL_SIZES, ('w3', 'w4', 'w5')):
        pad = jnp.zeros((K_MAX - k, EMBED_DIM, NUM_FILTERS), jnp.float32)
        blocks.append(jnp.concatenate([params[wk], pad], axis=0))     # (K_MAX, E, F)
    w_fused = jnp.concatenate(blocks, axis=2)                         # (K_MAX, E, 3F)

    tw = jnp.einsum('ve,kef->kvf', params['embedding'], w_fused)      # (K_MAX, V, 3F) f32
    tw_pad = jnp.zeros((K_MAX, V_PAD, F_TOTAL), jnp.float32)
    tw_pad = tw_pad.at[:, :VOCAB_SIZE, :].set(tw)

    b_fused = jnp.concatenate([params['b3'], params['b4'], params['b5']], axis=1)   # (1, 3F)
    tw_pad = tw_pad.at[0, BIAS_ROW, :].set(b_fused[0])

    tw_flat = tw_pad.reshape(K_MAX * V_PAD, F_TOTAL).astype(jnp.bfloat16)
    return {'tw': tw_flat, 'wfc': params['wfc'], 'bfc': params['bfc']}


def reference_forward(x_tokens, params):
    """Pure-JAX f32 reference with PyTorch TextCNN semantics."""
    emb = params['embedding'][x_tokens]                               # (B, L, E)
    pooled_list = []
    for k, wk, bk in zip(KERNEL_SIZES, ('w3', 'w4', 'w5'), ('b3', 'b4', 'b5')):
        T = SEQ_LEN - k + 1
        conv = jnp.zeros((x_tokens.shape[0], T, NUM_FILTERS), jnp.float32)
        for j in range(k):
            conv = conv + jnp.einsum('bte,ef->btf', emb[:, j:j + T, :], params[wk][j])
        conv = jnp.maximum(conv + params[bk][None, :, :], 0.0)
        pooled_list.append(jnp.max(conv, axis=1))
    concatenated = jnp.concatenate(pooled_list, axis=1)
    return concatenated @ params['wfc'] + params['bfc']


if __name__ == "__main__":
    key = jax.random.PRNGKey(0)
    k_param, k_data = jax.random.split(key)
    params = init_params(k_param)
    fused = fuse_params(params)                       # one-time prep, outside jit
    x = jax.random.randint(k_data, (BATCH, SEQ_LEN), 0, VOCAB_SIZE, dtype=jnp.int32)

    logits = textcnn_forward(x, fused)
    jax.block_until_ready(logits)

    ref = reference_forward(x, params)
    assert logits.shape == (BATCH, NUM_CLASSES)
    # Tolerance accounts for bf16 MXU operands (folded table + bias) vs the full-f32 reference.
    assert jnp.allclose(logits, ref, atol=2e-2, rtol=1e-2), (logits, ref)

    print("KERNEL_OK")
</pallas_src>

<mosaic_0001>
module attributes {stable_mosaic.version = 11 : i64} {
  func.func @textcnn_kernel(%arg0: memref<32x5xi32, #tpu.memory_space<vmem>>, %arg1: memref<640x48xbf16, #tpu.memory_space<vmem>>, %arg2: memref<48x2xf32, #tpu.memory_space<vmem>>, %arg3: memref<1x2xf32, #tpu.memory_space<vmem>>, %arg4: memref<2x2xf32, #tpu.memory_space<vmem>>) attributes {dimension_semantics = [], scalar_prefetch = 0 : i64, scratch_operands = 0 : i64, tpu.core_type = #tpu.core_type<tc>} {
    %c0 = arith.constant 0 : index
    %c0_0 = arith.constant 0 : index
    %0 = vector.load %arg0[%c0, %c0_0] : memref<32x5xi32, #tpu.memory_space<vmem>>, vector<32x5xi32>
    %1 = tpu.iota {dimensions = array<i32: 1>} : vector<32x128xi32>
    %2 = vector.extract_strided_slice %0 {offsets = [0, 0], sizes = [32, 1], strides = [1, 1]} : vector<32x5xi32> to vector<32x1xi32>
    %3 = vector.broadcast %2 : vector<32x1xi32> to vector<32x128xi32>
    %4 = arith.cmpi eq, %3, %1 : vector<32x128xi32>
    %c100_i32 = arith.constant 100 : i32
    %5 = vector.broadcast %c100_i32 : i32 to vector<32x128xi32>
    %6 = arith.cmpi eq, %1, %5 : vector<32x128xi32>
    %7 = arith.ori %4, %6 : vector<32x128xi1>
    %cst = arith.constant 1.000000e+00 : f32
    %cst_1 = arith.constant 0.000000e+00 : f32
    %8 = vector.broadcast %cst : f32 to vector<32x128xf32>
    %9 = vector.broadcast %cst_1 : f32 to vector<32x128xf32>
    %10 = arith.select %7, %8, %9 : vector<32x128xi1>, vector<32x128xf32>
    %11 = arith.truncf %10 : vector<32x128xf32> to vector<32x128xbf16>
    %12 = vector.extract_strided_slice %0 {offsets = [0, 1], sizes = [32, 1], strides = [1, 1]} : vector<32x5xi32> to vector<32x1xi32>
    %13 = vector.broadcast %12 : vector<32x1xi32> to vector<32x128xi32>
    %14 = arith.cmpi eq, %13, %1 : vector<32x128xi32>
    %cst_2 = arith.constant 1.000000e+00 : f32
    %cst_3 = arith.constant 0.000000e+00 : f32
    %15 = vector.broadcast %cst_2 : f32 to vector<32x128xf32>
    %16 = vector.broadcast %cst_3 : f32 to vector<32x128xf32>
    %17 = arith.select %14, %15, %16 : vector<32x128xi1>, vector<32x128xf32>
    %18 = arith.truncf %17 : vector<32x128xf32> to vector<32x128xbf16>
    %19 = vector.extract_strided_slice %0 {offsets = [0, 2], sizes = [32, 1], strides = [1, 1]} : vector<32x5xi32> to vector<32x1xi32>
    %20 = vector.broadcast %19 : vector<32x1xi32> to vector<32x128xi32>
    %21 = arith.cmpi eq, %20, %1 : vector<32x128xi32>
    %cst_4 = arith.constant 1.000000e+00 : f32
    %cst_5 = arith.constant 0.000000e+00 : f32
    %22 = vector.broadcast %cst_4 : f32 to vector<32x128xf32>
    %23 = vector.broadcast %cst_5 : f32 to vector<32x128xf32>
    %24 = arith.select %21, %22, %23 : vector<32x128xi1>, vector<32x128xf32>
    %25 = arith.truncf %24 : vector<32x128xf32> to vector<32x128xbf16>
    %26 = vector.extract_strided_slice %0 {offsets = [0, 3], sizes = [32, 1], strides = [1, 1]} : vector<32x5xi32> to vector<32x1xi32>
    %27 = vector.broadcast %26 : vector<32x1xi32> to vector<32x128xi32>
    %28 = arith.cmpi eq, %27, %1 : vector<32x128xi32>
    %cst_6 = arith.constant 1.000000e+00 : f32
    %cst_7 = arith.constant 0.000000e+00 : f32
    %29 = vector.broadcast %cst_6 : f32 to vector<32x128xf32>
    %30 = vector.broadcast %cst_7 : f32 to vector<32x128xf32>
    %31 = arith.select %28, %29, %30 : vector<32x128xi1>, vector<32x128xf32>
    %32 = arith.truncf %31 : vector<32x128xf32> to vector<32x128xbf16>
    %33 = vector.extract_strided_slice %0 {offsets = [0, 4], sizes = [32, 1], strides = [1, 1]} : vector<32x5xi32> to vector<32x1xi32>
    %34 = vector.broadcast %33 : vector<32x1xi32> to vector<32x128xi32>
    %35 = arith.cmpi eq, %34, %1 : vector<32x128xi32>
    %cst_8 = arith.constant 1.000000e+00 : f32
    %cst_9 = arith.constant 0.000000e+00 : f32
    %36 = vector.broadcast %cst_8 : f32 to vector<32x128xf32>
    %37 = vector.broadcast %cst_9 : f32 to vector<32x128xf32>
    %38 = arith.select %35, %36, %37 : vector<32x128xi1>, vector<32x128xf32>
    %39 = arith.truncf %38 : vector<32x128xf32> to vector<32x128xbf16>
    %40 = tpu.concatenate %11, %18, %25, %32, %39 in 1 : vector<32x128xbf16>, vector<32x128xbf16>, vector<32x128xbf16>, vector<32x128xbf16>, vector<32x128xbf16> -> vector<32x640xbf16>
    %c0_10 = arith.constant 0 : index
    %c0_11 = arith.constant 0 : index
    %41 = vector.load %arg1[%c0_10, %c0_11] : memref<640x48xbf16, #tpu.memory_space<vmem>>, vector<640x48xbf16>
    %cst_12 = arith.constant dense<0.000000e+00> : vector<32x48xf32>
    %42 = tpu.matmul %40, %41, %cst_12 {dimension_numbers = #tpu.dot_dimension_numbers<[1], [0], [0], [1], [0, 0, 1, 1], [], []>} : vector<32x640xbf16>, vector<640x48xbf16>, vector<32x48xf32> -> vector<32x48xf32>
    %cst_13 = arith.constant 0.000000e+00 : f32
    %43 = vector.broadcast %cst_13 : f32 to vector<32x48xf32>
    %44 = arith.maximumf %42, %43 : vector<32x48xf32>
    %45 = tpu.iota {dimensions = array<i32: 0>} : vector<32x48xi32>
    %c16_i32 = arith.constant 16 : i32
    %c0_i32 = arith.constant 0 : i32
    %46 = arith.cmpi eq, %c16_i32, %c0_i32 : i32
    %c1_i32 = arith.constant 1 : i32
    %47 = arith.select %46, %c1_i32, %c16_i32 : i32
    %48 = vector.broadcast %47 : i32 to vector<32x48xi32>
    %49 = arith.remsi %45, %48 : vector<32x48xi32>
    %c0_i32_14 = arith.constant 0 : i32
    %50 = vector.broadcast %c0_i32_14 : i32 to vector<32x48xi32>
    %51 = arith.cmpi ne, %49, %50 : vector<32x48xi32>
    %c0_i32_15 = arith.constant 0 : i32
    %52 = vector.broadcast %c0_i32_15 : i32 to vector<32x48xi32>
    %53 = arith.cmpi slt, %49, %52 : vector<32x48xi32>
    %c0_i32_16 = arith.constant 0 : i32
    %54 = arith.cmpi slt, %47, %c0_i32_16 : i32
    %55 = vector.broadcast %54 : i1 to vector<32x48xi1>
    %56 = vector.broadcast %55 : vector<32x48xi1> to vector<32x48xi1>
    %57 = arith.xori %53, %56 : vector<32x48xi1>
    %58 = arith.andi %57, %51 : vector<32x48xi1>
    %59 = vector.broadcast %47 : i32 to vector<32x48xi32>
    %60 = arith.addi %49, %59 : vector<32x48xi32>
    %61 = arith.select %58, %60, %49 : vector<32x48xi1>, vector<32x48xi32>
    %62 = tpu.iota {dimensions = array<i32: 1>} : vector<32x48xi32>
    %c13_i32 = arith.constant 13 : i32
    %63 = vector.broadcast %c13_i32 : i32 to vector<32x48xi32>
    %c16_i32_17 = arith.constant 16 : i32
    %64 = vector.broadcast %c16_i32_17 : i32 to vector<32x48xi32>
    %65 = arith.cmpi sge, %62, %64 : vector<32x48xi32>
    %c12_i32 = arith.constant 12 : i32
    %66 = vector.broadcast %c12_i32 : i32 to vector<32x48xi32>
    %67 = arith.select %65, %66, %63 : vector<32x48xi1>, vector<32x48xi32>
    %c32_i32 = arith.constant 32 : i32
    %68 = vector.broadcast %c32_i32 : i32 to vector<32x48xi32>
    %69 = arith.cmpi sge, %62, %68 : vector<32x48xi32>
    %c11_i32 = arith.constant 11 : i32
    %70 = vector.broadcast %c11_i32 : i32 to vector<32x48xi32>
    %71 = arith.select %69, %70, %67 : vector<32x48xi1>, vector<32x48xi32>
    %72 = arith.cmpi sle, %61, %71 : vector<32x48xi32>
    %cst_18 = arith.constant 0.000000e+00 : f32
    %73 = vector.broadcast %cst_18 : f32 to vector<32x48xf32>
    %74 = arith.select %72, %44, %73 : vector<32x48xi1>, vector<32x48xf32>
    %75 = vector.shape_cast %74 : vector<32x48xf32> to vector<2x16x48xf32>
    %cst_19 = arith.constant dense<0xFF800000> : vector<2x48xf32>
    %76 = vector.multi_reduction <maximumf>, %75, %cst_19 [1] : vector<2x16x48xf32> to vector<2x48xf32>
    %c0_20 = arith.constant 0 : index
    %c0_21 = arith.constant 0 : index
    %77 = vector.load %arg2[%c0_20, %c0_21] : memref<48x2xf32, #tpu.memory_space<vmem>>, vector<48x2xf32>
    %cst_22 = arith.constant dense<0.000000e+00> : vector<2x2xf32>
    %78 = tpu.matmul %76, %77, %cst_22 {dimension_numbers = #tpu.dot_dimension_numbers<[1], [0], [0], [1], [0, 0, 1, 1], [], []>} : vector<2x48xf32>, vector<48x2xf32>, vector<2x2xf32> -> vector<2x2xf32>
    %c0_23 = arith.constant 0 : index
    %c0_24 = arith.constant 0 : index
    %79 = vector.load %arg3[%c0_23, %c0_24] : memref<1x2xf32, #tpu.memory_space<vmem>>, vector<1x2xf32>
    %80 = vector.broadcast %79 : vector<1x2xf32> to vector<2x2xf32>
    %81 = arith.addf %78, %80 : vector<2x2xf32>
    %c0_25 = arith.constant 0 : index
    %c0_26 = arith.constant 0 : index
    %82 = vector.load %arg4[%c0_25, %c0_26] : memref<2x2xf32, #tpu.memory_space<vmem>>, vector<2x2xf32>
    tpu.vector_store %arg4[%c0_25, %c0_26], %81 {strides = array<i32>} : memref<2x2xf32, #tpu.memory_space<vmem>>, vector<2x2xf32>,
    return
  }
}

</mosaic_0001>

<llo_original>
// kernel: textcnn_forward.1
$region0: #{textcnn_forward.1}
  #allocation0 [shape = 'u32[]', space=smem, size = 0x4, offset = 0x4, fixed_abs, tag = 'smem constant byte address 0x4 - core index']
  #allocation1 [shape = 'u32[144,128]{1,0:T(1,128)}', space=vmem, size = 0x12000, scoped, tag = 'internal scratch']
  %s0 = inlined_call_operand.vmem [shape: s32[32,5], index: 0, kind: input, shape index: {}]
  %s1 = inlined_call_operand.vmem [shape: bf16[640,48], index: 1, kind: input, shape index: {}]
  %s2 = inlined_call_operand.vmem [shape: f32[48,2], index: 2, kind: input, shape index: {}]
  %s3 = inlined_call_operand.vmem [shape: f32[1,2], index: 3, kind: input, shape index: {}]
  %s4 = inlined_call_operand.hbm [shape: f32[2,2], index: 4, kind: output, shape index: {}]
  %s5 = sld [smem:[#allocation0]]
  $region26: #{textcnn_forward.1} parent=0
    _
  %s7 = ssub.s32 1, %s5
  %s8 = scalar_select 0, %s7, %s5
  $region1: #{textcnn_forward.1} parent=0
    #allocation2 [shape = 'u8[1024]{0}', space=vmem, size = 0x400, scoped, tag = 'output window, operand 0, single buffered']
    #allocation3 [shape = 's32[1]{0}', space=sflag, size = 0x4, scoped, tag = 'scoped memory for textcnn_forward.1']
    %9 = vsyncpa [#allocation3], 0
    // Predicated region
    $region2: #{textcnn_forward.1} parent=1 // pred_check
      _
    $region3: #{textcnn_forward.1} parent=1 // pred_check_branch
      %11 = sbr.rel (0) target = $region5
    $region4: #{textcnn_forward.1} parent=1 // pred_region
      _
    $region5: #{textcnn_forward.1} parent=1 // pred_fallthru
      _
    // Predicated region
    $region6: #{textcnn_forward.1} parent=1 // pred_check
      _
    $region7: #{textcnn_forward.1} parent=1 // pred_check_branch
      %13 = sbr.rel (0) target = $region9
    $region8: #{textcnn_forward.1} parent=1 // pred_region
      _
    $region9: #{textcnn_forward.1} parent=1 // pred_fallthru
      _
    // Predicated region
    $region10: #{textcnn_forward.1} parent=1 // pred_check
      _
    $region11: #{textcnn_forward.1} parent=1 // pred_check_branch
      %15 = sbr.rel (0) target = $region13
    $region12: #{textcnn_forward.1} parent=1 // pred_region
      _
    $region13: #{textcnn_forward.1} parent=1 // pred_fallthru
      _
    // Predicated region
    $region14: #{textcnn_forward.1} parent=1 // pred_check
      _
    $region15: #{textcnn_forward.1} parent=1 // pred_check_branch
      %17 = sbr.rel (0) target = $region17
    $region16: #{textcnn_forward.1} parent=1 // pred_region
      _
    $region17: #{textcnn_forward.1} parent=1 // pred_fallthru
      _
    %v19 = vld [vmem:[%s0] sm:$0xff]
    %v20 = vld [vmem:[%s0 + $0x8] sm:$0xff]
    %v21 = vld [vmem:[%s0 + $0x10] sm:$0xff]
    %v22 = vld [vmem:[%s0 + $0x18] sm:$0xff]
    %v23 = vlaneseq
    %v24 = vand.u32 %v23, 127
    %25 = vset.pattern.permute.xlu0 0
    %26 = vperm.xlu0 %25, %v19
    %v27 = vpop.permute.xlu0 %26
    %28 = vset.pattern.permute.xlu0 0
    %29 = vperm.xlu0 %28, %v20
    %v30 = vpop.permute.xlu0 %29
    %31 = vset.pattern.permute.xlu0 0
    %32 = vperm.xlu0 %31, %v21
    %v33 = vpop.permute.xlu0 %32
    %34 = vset.pattern.permute.xlu0 0
    %35 = vperm.xlu0 %34, %v22
    %v36 = vpop.permute.xlu0 %35
    %vm37 = vcmp.eq.s32.totalorder %v27, %v24
    %vm38 = vcmp.eq.s32.totalorder %v30, %v24
    %vm39 = vcmp.eq.s32.totalorder %v33, %v24
    %vm40 = vcmp.eq.s32.totalorder %v36, %v24
    %vm41 = vcmp.eq.s32.totalorder %v24, 100
    %vm42 = vmor %vm37, %vm41
    %vm43 = vmor %vm38, %vm41
    %vm44 = vmor %vm39, %vm41
    %vm45 = vmor %vm40, %vm41
    %v46 = vsel %vm42, 1.0, 0.0
    %v47 = vsel %vm43, 1.0, 0.0
    %v48 = vsel %vm44, 1.0, 0.0
    %v49 = vsel %vm45, 1.0, 0.0
    %v50 = vpack.c.bf16 %v47, %v46
    %v51 = vpack.c.bf16 %v49, %v48
    %52 = vset.pattern.permute.xlu0 1
    %53 = vperm.xlu0 %52, %v19
    %v54 = vpop.permute.xlu0 %53
    %55 = vset.pattern.permute.xlu0 1
    %56 = vperm.xlu0 %55, %v20
    %v57 = vpop.permute.xlu0 %56
    %58 = vset.pattern.permute.xlu0 1
    %59 = vperm.xlu0 %58, %v21
    %v60 = vpop.permute.xlu0 %59
    %61 = vset.pattern.permute.xlu0 1
    %62 = vperm.xlu0 %61, %v22
    %v63 = vpop.permute.xlu0 %62
    %vm64 = vcmp.eq.s32.totalorder %v54, %v24
    %vm65 = vcmp.eq.s32.totalorder %v57, %v24
    %vm66 = vcmp.eq.s32.totalorder %v60, %v24
    %vm67 = vcmp.eq.s32.totalorder %v63, %v24
    %v68 = vsel %vm64, 1.0, 0.0
    %v69 = vsel %vm65, 1.0, 0.0
    %v70 = vsel %vm66, 1.0, 0.0
    %v71 = vsel %vm67, 1.0, 0.0
    %v72 = vpack.c.bf16 %v69, %v68
    %v73 = vpack.c.bf16 %v71, %v70
    %74 = vset.pattern.permute.xlu0 2
    %75 = vperm.xlu0 %74, %v19
    %v76 = vpop.permute.xlu0 %75
    %77 = vset.pattern.permute.xlu0 2
    %78 = vperm.xlu0 %77, %v20
    %v79 = vpop.permute.xlu0 %78
    %80 = vset.pattern.permute.xlu0 2
    %81 = vperm.xlu0 %80, %v21
    %v82 = vpop.permute.xlu0 %81
    %83 = vset.pattern.permute.xlu0 2
    %84 = vperm.xlu0 %83, %v22
    %v85 = vpop.permute.xlu0 %84
    %vm86 = vcmp.eq.s32.totalorder %v76, %v24
    %vm87 = vcmp.eq.s32.totalorder %v79, %v24
    %vm88 = vcmp.eq.s32.totalorder %v82, %v24
    %vm89 = vcmp.eq.s32.totalorder %v85, %v24
    %v90 = vsel %vm86, 1.0, 0.0
    %v91 = vsel %vm87, 1.0, 0.0
    %v92 = vsel %vm88, 1.0, 0.0
    %v93 = vsel %vm89, 1.0, 0.0
    %v94 = vpack.c.bf16 %v91, %v90
    %v95 = vpack.c.bf16 %v93, %v92
    %96 = vset.pattern.permute.xlu0 3
    %97 = vperm.xlu0 %96, %v19
    %v98 = vpop.permute.xlu0 %97
    %99 = vset.pattern.permute.xlu0 3
    %100 = vperm.xlu0 %99, %v20
    %v101 = vpop.permute.xlu0 %100
    %102 = vset.pattern.permute.xlu0 3
    %103 = vperm.xlu0 %102, %v21
    %v104 = vpop.permute.xlu0 %103
    %105 = vset.pattern.permute.xlu0 3
    %106 = vperm.xlu0 %105, %v22
    %v107 = vpop.permute.xlu0 %106
    %vm108 = vcmp.eq.s32.totalorder %v98, %v24
    %vm109 = vcmp.eq.s32.totalorder %v101, %v24
    %vm110 = vcmp.eq.s32.totalorder %v104, %v24
    %vm111 = vcmp.eq.s32.totalorder %v107, %v24
    %v112 = vsel %vm108, 1.0, 0.0
    %v113 = vsel %vm109, 1.0, 0.0
    %v114 = vsel %vm110, 1.0, 0.0
    %v115 = vsel %vm111, 1.0, 0.0
    %v116 = vpack.c.bf16 %v113, %v112
    %v117 = vpack.c.bf16 %v115, %v114
    %118 = vset.pattern.permute.xlu0 4
    %119 = vperm.xlu0 %118, %v19
    %v120 = vpop.permute.xlu0 %119
    %121 = vset.pattern.permute.xlu0 4
    %122 = vperm.xlu0 %121, %v20
    %v123 = vpop.permute.xlu0 %122
    %124 = vset.pattern.permute.xlu0 4
    %125 = vperm.xlu0 %124, %v21
    %v126 = vpop.permute.xlu0 %125
    %127 = vset.pattern.permute.xlu0 4
    %128 = vperm.xlu0 %127, %v22
    %v129 = vpop.permute.xlu0 %128
    %vm130 = vcmp.eq.s32.totalorder %v120, %v24
    %vm131 = vcmp.eq.s32.totalorder %v123, %v24
    %vm132 = vcmp.eq.s32.totalorder %v126, %v24
    %vm133 = vcmp.eq.s32.totalorder %v129, %v24
    %v134 = vsel %vm130, 1.0, 0.0
    %v135 = vsel %vm131, 1.0, 0.0
    %v136 = vsel %vm132, 1.0, 0.0
    %v137 = vsel %vm133, 1.0, 0.0
    %v138 = vpack.c.bf16 %v135, %v134
    %v139 = vpack.c.bf16 %v137, %v136
    %v140 = vld [vmem:[%s1] sm:$0xf]
    %v141 = vld [vmem:[%s1 + $0x4] sm:$0xf]
    %v142 = vld [vmem:[%s1 + $0x8] sm:$0xf]
    %v143 = vld [vmem:[%s1 + $0xc] sm:$0xf]
    %v144 = vld [vmem:[%s1 + $0x10] sm:$0xf]
    %v145 = vld [vmem:[%s1 + $0x14] sm:$0xf]
    %v146 = vld [vmem:[%s1 + $0x18] sm:$0xf]
    %v147 = vld [vmem:[%s1 + $0x1c] sm:$0xf]
    %v148 = vld [vmem:[%s1 + $0x20] sm:$0xf]
    %v149 = vld [vmem:[%s1 + $0x24] sm:$0xf]
    %v150 = vld [vmem:[%s1 + $0x28] sm:$0xf]
    %v151 = vld [vmem:[%s1 + $0x2c] sm:$0xf]
    %v152 = vld [vmem:[%s1 + $0x30] sm:$0xf]
    %v153 = vld [vmem:[%s1 + $0x34] sm:$0xf]
    %v154 = vld [vmem:[%s1 + $0x38] sm:$0xf]
    %v155 = vld [vmem:[%s1 + $0x3c] sm:$0xf]
    %v156 = vld [vmem:[%s1 + $0x40] sm:$0xf]
    %v157 = vld [vmem:[%s1 + $0x44] sm:$0xf]
    %v158 = vld [vmem:[%s1 + $0x48] sm:$0xf]
    %v159 = vld [vmem:[%s1 + $0x4c] sm:$0xf]
    %v160 = vld [vmem:[%s1 + $0x50] sm:$0xf]
    %v161 = vld [vmem:[%s1 + $0x54] sm:$0xf]
    %v162 = vld [vmem:[%s1 + $0x58] sm:$0xf]
    %v163 = vld [vmem:[%s1 + $0x5c] sm:$0xf]
    %v164 = vld [vmem:[%s1 + $0x60] sm:$0xf]
    %v165 = vld [vmem:[%s1 + $0x64] sm:$0xf]
    %v166 = vld [vmem:[%s1 + $0x68] sm:$0xf]
    %v167 = vld [vmem:[%s1 + $0x6c] sm:$0xf]
    %v168 = vld [vmem:[%s1 + $0x70] sm:$0xf]
    %v169 = vld [vmem:[%s1 + $0x74] sm:$0xf]
    %v170 = vld [vmem:[%s1 + $0x78] sm:$0xf]
    %v171 = vld [vmem:[%s1 + $0x7c] sm:$0xf]
    %v172 = vld [vmem:[%s1 + $0x80] sm:$0xf]
    %v173 = vld [vmem:[%s1 + $0x84] sm:$0xf]
    %v174 = vld [vmem:[%s1 + $0x88] sm:$0xf]
    %v175 = vld [vmem:[%s1 + $0x8c] sm:$0xf]
    %v176 = vld [vmem:[%s1 + $0x90] sm:$0xf]
    %v177 = vld [vmem:[%s1 + $0x94] sm:$0xf]
    %v178 = vld [vmem:[%s1 + $0x98] sm:$0xf]
    %v179 = vld [vmem:[%s1 + $0x9c] sm:$0xf]
    %v180 = vld [vmem:[%s1 + $0xa0] sm:$0xf]
    %v181 = vld [vmem:[%s1 + $0xa4] sm:$0xf]
    %v182 = vld [vmem:[%s1 + $0xa8] sm:$0xf]
    %v183 = vld [vmem:[%s1 + $0xac] sm:$0xf]
    %v184 = vld [vmem:[%s1 + $0xb0] sm:$0xf]
    %v185 = vld [vmem:[%s1 + $0xb4] sm:$0xf]
    %v186 = vld [vmem:[%s1 + $0xb8] sm:$0xf]
    %v187 = vld [vmem:[%s1 + $0xbc] sm:$0xf]
    %v188 = vld [vmem:[%s1 + $0xc0] sm:$0xf]
    %v189 = vld [vmem:[%s1 + $0xc4] sm:$0xf]
    %v190 = vld [vmem:[%s1 + $0xc8] sm:$0xf]
    %v191 = vld [vmem:[%s1 + $0xcc] sm:$0xf]
    %v192 = vld [vmem:[%s1 + $0xd0] sm:$0xf]
    %v193 = vld [vmem:[%s1 + $0xd4] sm:$0xf]
    %v194 = vld [vmem:[%s1 + $0xd8] sm:$0xf]
    %v195 = vld [vmem:[%s1 + $0xdc] sm:$0xf]
    %v196 = vld [vmem:[%s1 + $0xe0] sm:$0xf]
    %v197 = vld [vmem:[%s1 + $0xe4] sm:$0xf]
    %v198 = vld [vmem:[%s1 + $0xe8] sm:$0xf]
    %v199 = vld [vmem:[%s1 + $0xec] sm:$0xf]
    %v200 = vld [vmem:[%s1 + $0xf0] sm:$0xf]
    %v201 = vld [vmem:[%s1 + $0xf4] sm:$0xf]
    %v202 = vld [vmem:[%s1 + $0xf8] sm:$0xf]
    %v203 = vld [vmem:[%s1 + $0xfc] sm:$0xf]
    %v204 = vld [vmem:[%s1 + $0x100] sm:$0xf]
    %v205 = vld [vmem:[%s1 + $0x104] sm:$0xf]
    %v206 = vld [vmem:[%s1 + $0x108] sm:$0xf]
    %v207 = vld [vmem:[%s1 + $0x10c] sm:$0xf]
    %v208 = vld [vmem:[%s1 + $0x110] sm:$0xf]
    %v209 = vld [vmem:[%s1 + $0x114] sm:$0xf]
    %v210 = vld [vmem:[%s1 + $0x118] sm:$0xf]
    %v211 = vld [vmem:[%s1 + $0x11c] sm:$0xf]
    %v212 = vld [vmem:[%s1 + $0x120] sm:$0xf]
    %v213 = vld [vmem:[%s1 + $0x124] sm:$0xf]
    %v214 = vld [vmem:[%s1 + $0x128] sm:$0xf]
    %v215 = vld [vmem:[%s1 + $0x12c] sm:$0xf]
    %v216 = vld [vmem:[%s1 + $0x130] sm:$0xf]
    %v217 = vld [vmem:[%s1 + $0x134] sm:$0xf]
    %v218 = vld [vmem:[%s1 + $0x138] sm:$0xf]
    %v219 = vld [vmem:[%s1 + $0x13c] sm:$0xf]
    %v300 = vunpack.c.l.b16 %v140
    %v301 = vunpack.c.l.b16 %v141
    %v302 = vunpack.c.l.b16 %v142
    %v303 = vunpack.c.l.b16 %v143
    %v304 = vunpack.c.l.b16 %v144
    %v305 = vunpack.c.l.b16 %v145
    %v306 = vunpack.c.l.b16 %v146
    %v307 = vunpack.c.l.b16 %v147
    %v308 = vunpack.c.l.b16 %v148
    %v309 = vunpack.c.l.b16 %v149
    %v310 = vunpack.c.l.b16 %v150
    %v311 = vunpack.c.l.b16 %v151
    %v312 = vunpack.c.l.b16 %v152
    %v313 = vunpack.c.l.b16 %v153
    %v314 = vunpack.c.l.b16 %v154
    %v315 = vunpack.c.l.b16 %v155
    %v316 = vunpack.c.l.b16 %v156
    %v317 = vunpack.c.l.b16 %v157
    %v318 = vunpack.c.l.b16 %v158
    %v319 = vunpack.c.l.b16 %v159
    %v320 = vunpack.c.l.b16 %v160
    %v321 = vunpack.c.l.b16 %v161
    %v322 = vunpack.c.l.b16 %v162
    %v323 = vunpack.c.l.b16 %v163
    %v324 = vunpack.c.l.b16 %v164
    %v325 = vunpack.c.l.b16 %v165
    %v326 = vunpack.c.l.b16 %v166
    %v327 = vunpack.c.l.b16 %v167
    %v328 = vunpack.c.l.b16 %v168
    %v329 = vunpack.c.l.b16 %v169
    %v330 = vunpack.c.l.b16 %v170
    %v331 = vunpack.c.l.b16 %v171
    %v332 = vunpack.c.l.b16 %v172
    %v333 = vunpack.c.l.b16 %v173
    %v334 = vunpack.c.l.b16 %v174
    %v335 = vunpack.c.l.b16 %v175
    %v336 = vunpack.c.l.b16 %v176
    %v337 = vunpack.c.l.b16 %v177
    %v338 = vunpack.c.l.b16 %v178
    %v339 = vunpack.c.l.b16 %v179
    %v340 = vunpack.c.l.b16 %v180
    %v341 = vunpack.c.l.b16 %v181
    %v342 = vunpack.c.l.b16 %v182
    %v343 = vunpack.c.l.b16 %v183
    %v344 = vunpack.c.l.b16 %v184
    %v345 = vunpack.c.l.b16 %v185
    %v346 = vunpack.c.l.b16 %v186
    %v347 = vunpack.c.l.b16 %v187
    %v348 = vunpack.c.l.b16 %v188
    %v349 = vunpack.c.l.b16 %v189
    %v350 = vunpack.c.l.b16 %v190
    %v351 = vunpack.c.l.b16 %v191
    %v352 = vunpack.c.l.b16 %v192
    %v353 = vunpack.c.l.b16 %v193
    %v354 = vunpack.c.l.b16 %v194
    %v355 = vunpack.c.l.b16 %v195
    %v356 = vunpack.c.l.b16 %v196
    %v357 = vunpack.c.l.b16 %v197
    %v358 = vunpack.c.l.b16 %v198
    %v359 = vunpack.c.l.b16 %v199
    %v360 = vunpack.c.l.b16 %v200
    %v361 = vunpack.c.l.b16 %v201
    %v362 = vunpack.c.l.b16 %v202
    %v363 = vunpack.c.l.b16 %v203
    %v364 = vunpack.c.l.b16 %v204
    %v365 = vunpack.c.l.b16 %v205
    %v366 = vunpack.c.l.b16 %v206
    %v367 = vunpack.c.l.b16 %v207
    %v368 = vunpack.c.l.b16 %v208
    %v369 = vunpack.c.l.b16 %v209
    %v370 = vunpack.c.l.b16 %v210
    %v371 = vunpack.c.l.b16 %v211
    %v372 = vunpack.c.l.b16 %v212
    %v373 = vunpack.c.l.b16 %v213
    %v374 = vunpack.c.l.b16 %v214
    %v375 = vunpack.c.l.b16 %v215
    %v376 = vunpack.c.l.b16 %v216
    %v377 = vunpack.c.l.b16 %v217
    %v378 = vunpack.c.l.b16 %v218
    %v379 = vunpack.c.l.b16 %v219
    %v380 = vpack.c.b16 %v301, %v300
    %v381 = vpack.c.b16 %v303, %v302
    %v382 = vpack.c.b16 %v305, %v304
    %v383 = vpack.c.b16 %v307, %v306
    %v384 = vpack.c.b16 %v309, %v308
    %v385 = vpack.c.b16 %v311, %v310
    %v386 = vpack.c.b16 %v313, %v312
    %v387 = vpack.c.b16 %v315, %v314
    %v388 = vpack.c.b16 %v317, %v316
    %v389 = vpack.c.b16 %v319, %v318
    %v390 = vpack.c.b16 %v321, %v320
    %v391 = vpack.c.b16 %v323, %v322
    %v392 = vpack.c.b16 %v325, %v324
    %v393 = vpack.c.b16 %v327, %v326
    %v394 = vpack.c.b16 %v329, %v328
    %v395 = vpack.c.b16 %v331, %v330
    %v396 = vpack.c.b16 %v333, %v332
    %v397 = vpack.c.b16 %v335, %v334
    %v398 = vpack.c.b16 %v337, %v336
    %v399 = vpack.c.b16 %v339, %v338
    %v400 = vpack.c.b16 %v341, %v340
    %v401 = vpack.c.b16 %v343, %v342
    %v402 = vpack.c.b16 %v345, %v344
    %v403 = vpack.c.b16 %v347, %v346
    %v404 = vpack.c.b16 %v349, %v348
    %v405 = vpack.c.b16 %v351, %v350
    %v406 = vpack.c.b16 %v353, %v352
    %v407 = vpack.c.b16 %v355, %v354
    %v408 = vpack.c.b16 %v357, %v356
    %v409 = vpack.c.b16 %v359, %v358
    %v410 = vpack.c.b16 %v361, %v360
    %v411 = vpack.c.b16 %v363, %v362
    %v412 = vpack.c.b16 %v365, %v364
    %v413 = vpack.c.b16 %v367, %v366
    %v414 = vpack.c.b16 %v369, %v368
    %v415 = vpack.c.b16 %v371, %v370
    %v416 = vpack.c.b16 %v373, %v372
    %v417 = vpack.c.b16 %v375, %v374
    %v418 = vpack.c.b16 %v377, %v376
    %v419 = vpack.c.b16 %v379, %v378
    %460 = vmatprep.subr.bf16.mxu0 0
    %461 = vmatpush1.bf16.msra.mxu0 %v387
    %462 = vmatprep.subr.bf16.mxu0 0
    %463 = vmatpush1.bf16.msra.mxu0 %v386
    %464 = vmatprep.subr.bf16.mxu0 0
    %465 = vmatpush1.bf16.msra.mxu0 %v385
    %466 = vmatprep.subr.bf16.mxu0 0
    %467 = vmatpush1.bf16.msra.mxu0 %v384
    %468 = vmatprep.subr.bf16.mxu0 0
    %469 = vmatpush1.bf16.msra.mxu0 %v383
    %470 = vmatprep.subr.bf16.mxu0 0
    %471 = vmatpush1.bf16.msra.mxu0 %v382
    %472 = vmatprep.subr.bf16.mxu0 0
    %473 = vmatpush1.bf16.msra.mxu0 %v381
    %474 = vmatprep.subr.bf16.mxu0 0
    %475 = vmatpush1.bf16.msra.mxu0 %v380
    %476 = vmatprep.subr.bf16.mxu0 0
    %477 = vmatpush2.bf16.msra.mxu0 %v395
    %478 = vmatprep.subr.bf16.mxu0 0
    %479 = vmatpush2.bf16.msra.mxu0 %v394
    %480 = vmatprep.subr.bf16.mxu0 0
    %481 = vmatpush2.bf16.msra.mxu0 %v393
    %482 = vmatprep.subr.bf16.mxu0 0
    %483 = vmatpush2.bf16.msra.mxu0 %v392
    %484 = vmatprep.subr.bf16.mxu0 0
    %485 = vmatpush2.bf16.msra.mxu0 %v391
    %486 = vmatprep.subr.bf16.mxu0 0
    %487 = vmatpush2.bf16.msra.mxu0 %v390
    %488 = vmatprep.subr.bf16.mxu0 0
    %489 = vmatpush2.bf16.msra.mxu0 %v389
    %490 = vmatprep.subr.bf16.mxu0 0
    %491 = vmatpush2.bf16.msra.mxu0 %v388
    %492 = vmatprep.mubr.bf16.mxu0 %v72
    %493 = vmatmul.mubr.bf16.gmra.mxu0 %v50
    %v494 = vpop.f32.mrf.mxu0
    %v495 = vadd.f32 0.0, %v494
    %v496 = vpop.f32.mrf.mxu0
    %v497 = vpop.f32.mrf.mxu0
    %v498 = vadd.f32 0.0, %v497
    %v499 = vpop.f32.mrf.mxu0
    %500 = vmatprep.mubr.bf16.mxu0 %v73
    %501 = vmatmul.mubr.bf16.gmra.mxu0 %v51
    %v502 = vpop.f32.mrf.mxu0
    %v503 = vadd.f32 0.0, %v502
    %v504 = vpop.f32.mrf.mxu0
    %v505 = vpop.f32.mrf.mxu0
    %v506 = vadd.f32 0.0, %v505
    %v507 = vpop.f32.mrf.mxu0
    %508 = vdwg.mxu0
    %509 = vmatprep.subr.bf16.mxu0 0
    %510 = vmatpush1.bf16.msra.mxu0 %v403
    %511 = vmatprep.subr.bf16.mxu0 0
    %512 = vmatpush1.bf16.msra.mxu0 %v402
    %513 = vmatprep.subr.bf16.mxu0 0
    %514 = vmatpush1.bf16.msra.mxu0 %v401
    %515 = vmatprep.subr.bf16.mxu0 0
    %516 = vmatpush1.bf16.msra.mxu0 %v400
    %517 = vmatprep.subr.bf16.mxu0 0
    %518 = vmatpush1.bf16.msra.mxu0 %v399
    %519 = vmatprep.subr.bf16.mxu0 0
    %520 = vmatpush1.bf16.msra.mxu0 %v398
    %521 = vmatprep.subr.bf16.mxu0 0
    %522 = vmatpush1.bf16.msra.mxu0 %v397
    %523 = vmatprep.subr.bf16.mxu0 0
    %524 = vmatpush1.bf16.msra.mxu0 %v396
    %525 = vmatprep.subr.bf16.mxu0 0
    %526 = vmatpush2.bf16.msra.mxu0 %v411
    %527 = vmatprep.subr.bf16.mxu0 0
    %528 = vmatpush2.bf16.msra.mxu0 %v410
    %529 = vmatprep.subr.bf16.mxu0 0
    %530 = vmatpush2.bf16.msra.mxu0 %v409
    %531 = vmatprep.subr.bf16.mxu0 0
    %532 = vmatpush2.bf16.msra.mxu0 %v408
    %533 = vmatprep.subr.bf16.mxu0 0
    %534 = vmatpush2.bf16.msra.mxu0 %v407
    %535 = vmatprep.subr.bf16.mxu0 0
    %536 = vmatpush2.bf16.msra.mxu0 %v406
    %537 = vmatprep.subr.bf16.mxu0 0
    %538 = vmatpush2.bf16.msra.mxu0 %v405
    %539 = vmatprep.subr.bf16.mxu0 0
    %540 = vmatpush2.bf16.msra.mxu0 %v404
    %541 = vmatprep.mubr.bf16.mxu0 %v116
    %542 = vmatmul.mubr.bf16.gmra.mxu0 %v94
    %v543 = vpop.f32.mrf.mxu0
    %v544 = vadd.f32 %v495, %v543
    %v545 = vpop.f32.mrf.mxu0
    %v546 = vpop.f32.mrf.mxu0
    %v547 = vadd.f32 %v498, %v546
    %v548 = vpop.f32.mrf.mxu0
    %549 = vmatprep.mubr.bf16.mxu0 %v117
    %550 = vmatmul.mubr.bf16.gmra.mxu0 %v95
    %v551 = vpop.f32.mrf.mxu0
    %v552 = vadd.f32 %v503, %v551
    %v553 = vpop.f32.mrf.mxu0
    %v554 = vpop.f32.mrf.mxu0
    %v555 = vadd.f32 %v506, %v554
    %v556 = vpop.f32.mrf.mxu0
    %557 = vdwg.mxu0
    %558 = vmatprep.subr.bf16.mxu0 0
    %559 = vmatpush1.bf16.msra.mxu0 %v419
    %560 = vmatprep.subr.bf16.mxu0 0
    %561 = vmatpush1.bf16.msra.mxu0 %v418
    %562 = vmatprep.subr.bf16.mxu0 0
    %563 = vmatpush1.bf16.msra.mxu0 %v417
    %564 = vmatprep.subr.bf16.mxu0 0
    %565 = vmatpush1.bf16.msra.mxu0 %v416
    %566 = vmatprep.subr.bf16.mxu0 0
    %567 = vmatpush1.bf16.msra.mxu0 %v415
    %568 = vmatprep.subr.bf16.mxu0 0
    %569 = vmatpush1.bf16.msra.mxu0 %v414
    %570 = vmatprep.subr.bf16.mxu0 0
    %571 = vmatpush1.bf16.msra.mxu0 %v413
    %572 = vmatprep.subr.bf16.mxu0 0
    %573 = vmatpush1.bf16.msra.mxu0 %v412
    %574 = vmatprep.subr.bf16.mxu0 0
    %575 = vmatpush2.bf16.msra.mxu0 0
    %576 = vmatprep.subr.bf16.mxu0 0
    %577 = vmatpush2.bf16.msra.mxu0 0
    %578 = vmatprep.subr.bf16.mxu0 0
    %579 = vmatpush2.bf16.msra.mxu0 0
    %580 = vmatprep.subr.bf16.mxu0 0
    %581 = vmatpush2.bf16.msra.mxu0 0
    %582 = vmatprep.subr.bf16.mxu0 0
    %583 = vmatpush2.bf16.msra.mxu0 0
    %584 = vmatprep.subr.bf16.mxu0 0
    %585 = vmatpush2.bf16.msra.mxu0 0
    %586 = vmatprep.subr.bf16.mxu0 0
    %587 = vmatpush2.bf16.msra.mxu0 0
    %588 = vmatprep.subr.bf16.mxu0 0
    %589 = vmatpush2.bf16.msra.mxu0 0
    %590 = vmatprep.mubr.bf16.mxu0 0
    %591 = vmatmul.mubr.bf16.gmra.mxu0 %v138
    %v592 = vpop.f32.mrf.mxu0
    %v593 = vadd.f32 %v544, %v592
    %v594 = vpop.f32.mrf.mxu0
    %v595 = vpop.f32.mrf.mxu0
    %v596 = vadd.f32 %v547, %v595
    %v597 = vpop.f32.mrf.mxu0
    %598 = vmatprep.mubr.bf16.mxu0 0
    %599 = vmatmul.mubr.bf16.gmra.mxu0 %v139
    %v600 = vpop.f32.mrf.mxu0
    %v601 = vadd.f32 %v552, %v600
    %v602 = vpop.f32.mrf.mxu0
    %v603 = vpop.f32.mrf.mxu0
    %v604 = vadd.f32 %v555, %v603
    %v605 = vpop.f32.mrf.mxu0
    %606 = vdwg.mxu0
    %v607 = vmax.f32 %v593, 0.0
    %v608 = vmax.f32 %v596, 0.0
    %v609 = vmax.f32 %v601, 0.0
    %v610 = vmax.f32 %v604, 0.0
    %v611 = vlaneseq
    %v612 = vshrl.u32 %v611, 7
    %v613 = vadd.s32 %v612, 8
    %v614 = vadd.s32 %v612, 16
    %v615 = vadd.s32 %v612, 24
    %vm616 = vcmp.lt.s32.totalorder %v612, 0
    %v617 = vsub.s32 0, %v612
    %v618 = vsel %vm616, %v617, %v612
    %v619 = vshrl.u32 %v618, 4
    %v620 = vand.u32 %v618, 15
    %v621 = vsub.s32 0, %v620
    %v622 = vsel %vm616, %v621, %v620
    %vm623 = vcmp.lt.s32.totalorder %v613, 0
    %v624 = vsub.s32 0, %v613
    %v625 = vsel %vm623, %v624, %v613
    %v626 = vshrl.u32 %v625, 4
    %v627 = vand.u32 %v625, 15
    %v628 = vsub.s32 0, %v627
    %v629 = vsel %vm623, %v628, %v627
    %vm630 = vcmp.lt.s32.totalorder %v614, 0
    %v631 = vsub.s32 0, %v614
    %v632 = vsel %vm630, %v631, %v614
    %v633 = vshrl.u32 %v632, 4
    %v634 = vand.u32 %v632, 15
    %v635 = vsub.s32 0, %v634
    %v636 = vsel %vm630, %v635, %v634
    %vm637 = vcmp.lt.s32.totalorder %v615, 0
    %v638 = vsub.s32 0, %v615
    %v639 = vsel %vm637, %v638, %v615
    %v640 = vshrl.u32 %v639, 4
    %v641 = vand.u32 %v639, 15
    %v642 = vsub.s32 0, %v641
    %v643 = vsel %vm637, %v642, %v641
    %vm644 = vcmp.ne.s32.totalorder %v622, 0
    %vm645 = vcmp.ne.s32.totalorder %v629, 0
    %vm646 = vcmp.ne.s32.totalorder %v636, 0
    %vm647 = vcmp.ne.s32.totalorder %v643, 0
    %vm648 = vcmp.lt.s32.totalorder %v622, 0
    %vm649 = vcmp.lt.s32.totalorder %v629, 0
    %vm650 = vcmp.lt.s32.totalorder %v636, 0
    %vm651 = vcmp.lt.s32.totalorder %v643, 0
    %vm652 = vmand %vm648, %vm644
    %vm653 = vmand %vm649, %vm645
    %vm654 = vmand %vm650, %vm646
    %vm655 = vmand %vm651, %vm647
    %v656 = vadd.s32 %v622, 16
    %v657 = vadd.s32 %v629, 16
    %v658 = vadd.s32 %v636, 16
    %v659 = vadd.s32 %v643, 16
    %v660 = vsel %vm652, %v656, %v622
    %v661 = vsel %vm653, %v657, %v629
    %v662 = vsel %vm654, %v658, %v636
    %v663 = vsel %vm655, %v659, %v643
    %vm664 = vcmp.ge.s32.totalorder %v24, 16
    %v665 = vsel %vm664, 12, 13
    %vm666 = vcmp.ge.s32.totalorder %v24, 32
    %v667 = vsel %vm666, 11, %v665
    %vm668 = vcmp.le.s32.totalorder %v660, %v667
    %vm669 = vcmp.le.s32.totalorder %v661, %v667
    %vm670 = vcmp.le.s32.totalorder %v662, %v667
    %vm671 = vcmp.le.s32.totalorder %v663, %v667
    %v672 = vsel %vm668, %v607, 0.0
    %v673 = vsel %vm669, %v608, 0.0
    %v674 = vsel %vm670, %v609, 0.0
    %v675 = vsel %vm671, %v610, 0.0
    %vm676 = vcmask 392192
    %v677 = vsel %vm676, %v672, -inf
    %v678 = vsel %vm676, %v673, -inf
    %v679 = vmax.f32 %v677, %v678
    %v680 = vrot.slane %v679, 4
    %v681 = vmax.f32 %v679, %v680
    %v682 = vrot.slane %v681, 2
    %v683 = vmax.f32 %v681, %v682
    %v684 = vrot.slane %v683, 1
    %v685 = vmax.f32 %v683, %v684
    %v686 = vsel %vm676, %v674, -inf
    %v687 = vsel %vm676, %v675, -inf
    %v688 = vmax.f32 %v686, %v687
    %v689 = vrot.slane %v688, 4
    %v690 = vmax.f32 %v688, %v689
    %v691 = vrot.slane %v690, 2
    %v692 = vmax.f32 %v690, %v691
    %v693 = vrot.slane %v692, 1
    %v694 = vmax.f32 %v692, %v693
    %v695 = vld [vmem:[%s2] sm:$0xff]
    %v696 = vld [vmem:[%s2 + $0x8] sm:$0xff]
    %v697 = vld [vmem:[%s2 + $0x10] sm:$0xff]
    %v698 = vld [vmem:[%s2 + $0x18] sm:$0xff]
    %v699 = vld [vmem:[%s2 + $0x20] sm:$0xff]
    %v700 = vld [vmem:[%s2 + $0x28] sm:$0xff]
    %v701 = vld [vmem:[%s3] sm:$0x1]
    %v703 = vlaneseq
    %v704 = vshrl.u32 %v703, 7
    %v705 = vsub.s32 0, %v704
    %v706 = vrot.slane %v701, %v705
    %vm710 = vcmask 1041409
    %v711 = vsel %vm710, %v694, %v685
    %v712 = vsel %vm676, %v711, 0
    %714 = vmatprep.subr.mxu0 0.0
    %715 = vmatpush1.msra.mxu0 0.0
    %716 = vmatprep.subr.mxu0 0.0
    %717 = vmatpush1.msra.mxu0 0.0
    %718 = vmatprep.subr.mxu0 0.0
    %719 = vmatpush1.msra.mxu0 0.0
    %720 = vmatprep.subr.mxu0 0.0
    %721 = vmatpush1.msra.mxu0 0.0
    %722 = vmatprep.subr.mxu0 0.0
    %723 = vmatpush1.msra.mxu0 0.0
    %724 = vmatprep.subr.mxu0 0.0
    %725 = vmatpush1.msra.mxu0 0.0
    %726 = vmatprep.subr.mxu0 0.0
    %727 = vmatpush1.msra.mxu0 0.0
    %728 = vmatprep.subr.mxu0 0.0
    %729 = vmatpush1.msra.mxu0 0.0
    %730 = vmatprep.subr.mxu0 0.0
    %731 = vmatpush1.msra.mxu0 0.0
    %732 = vmatprep.subr.mxu0 0.0
    %733 = vmatpush1.msra.mxu0 0.0
    %734 = vmatprep.subr.mxu0 0.0
    %735 = vmatpush1.msra.mxu0 %v700
    %736 = vmatprep.subr.mxu0 0.0
    %737 = vmatpush1.msra.mxu0 %v699
    %738 = vmatprep.subr.mxu0 0.0
    %739 = vmatpush1.msra.mxu0 %v698
    %740 = vmatprep.subr.mxu0 0.0
    %741 = vmatpush1.msra.mxu0 %v697
    %742 = vmatprep.subr.mxu0 0.0
    %743 = vmatpush1.msra.mxu0 %v696
    %744 = vmatprep.subr.mxu0 0.0
    %745 = vmatpush1.msra.mxu0 %v695
    %746 = vmatprep.subr.mxu0 0.0
    %747 = vmatpush2.msra.mxu0 0.0
    %748 = vmatprep.subr.mxu0 0.0
    %749 = vmatpush2.msra.mxu0 0.0
    %750 = vmatprep.subr.mxu0 0.0
    %751 = vmatpush2.msra.mxu0 0.0
    %752 = vmatprep.subr.mxu0 0.0
    %753 = vmatpush2.msra.mxu0 0.0
    %754 = vmatprep.subr.mxu0 0.0
    %755 = vmatpush2.msra.mxu0 0.0
    %756 = vmatprep.subr.mxu0 0.0
    %757 = vmatpush2.msra.mxu0 0.0
    %758 = vmatprep.subr.mxu0 0.0
    %759 = vmatpush2.msra.mxu0 0.0
    %760 = vmatprep.subr.mxu0 0.0
    %761 = vmatpush2.msra.mxu0 0.0
    %762 = vmatprep.subr.mxu0 0.0
    %763 = vmatpush2.msra.mxu0 0.0
    %764 = vmatprep.subr.mxu0 0.0
    %765 = vmatpush2.msra.mxu0 0.0
    %766 = vmatprep.subr.mxu0 0.0
    %767 = vmatpush2.msra.mxu0 0.0
    %768 = vmatprep.subr.mxu0 0.0
    %769 = vmatpush2.msra.mxu0 0.0
    %770 = vmatprep.subr.mxu0 0.0
    %771 = vmatpush2.msra.mxu0 0.0
    %772 = vmatprep.subr.mxu0 0.0
    %773 = vmatpush2.msra.mxu0 0.0
    %774 = vmatprep.subr.mxu0 0.0
    %775 = vmatpush2.msra.mxu0 0.0
    %776 = vmatprep.subr.mxu0 0.0
    %777 = vmatpush2.msra.mxu0 0.0
    %778 = vmatprep.mubr.f32.mxu0 0.0
    %779 = vmatmul.mubr.f32.gmra.mxu0 %v712
    %v780 = vpop.f32.mrf.mxu0
    %v781 = vadd.f32 %v706, %v780
    %v782 = vpop.f32.mrf.mxu0
    %783 = vdwg.mxu0
    %vm784 = vcmask 9216
    %785 = vst.msk [vmem:[#allocation2] sm:$0x3] %vm784, %v781
    // Predicated region
    $region18: #{textcnn_forward.1} parent=1 // pred_check
      _
    $region19: #{textcnn_forward.1} parent=1 // pred_check_branch
      %787 = sbr.rel (0) target = $region21
    $region20: #{textcnn_forward.1} parent=1 // pred_region
      %s789 = ssub.s32 32, 32
      %790 = vsyncadd [#allocation3], %s789
      %s792 = sshll.u32 [#allocation2], 4
      %s793 = int_to_ptr.vmem [resolvable:$true] %s792
      %795 = dma.vmem_to_hbm [thread:$0]  %s793, 32, %s4, [#allocation3]
    $region21: #{textcnn_forward.1} parent=1 // pred_fallthru
      _
    // Predicated region
    $region22: #{textcnn_forward.1} parent=1 // pred_check
      _
    $region23: #{textcnn_forward.1} parent=1 // pred_check_branch
      %797 = sbr.rel (0) target = $region25
    $region24: #{textcnn_forward.1} parent=1 // pred_region
      %798 = dma.done [#allocation3], 32
    $region25: #{textcnn_forward.1} parent=1 // pred_fallthru
      _
    %799 = vsyncpa [#allocation3], 1

</llo_original>
